<compile_context>
chip_gen: v6e
topology: v6e:2x2x1
jax: 0.10.0
libtpu: 0.0.40
codegen_flags: <defaults>
</compile_context>

<pallas_src>
import jax
import jax.numpy as jnp
from jax import lax
from jax.experimental import pallas as pl
from jax.experimental.pallas import tpu as pltpu

_LANES = 128
_ROW = 3 * _LANES          # 384 = lcm(3, 128): 128 whole (x, y, z) points per row
_CHUNK = 32                # rows per in-kernel step: 32*384 f32 = 12 vregs/operand


def _round_up(a: int, b: int) -> int:
    return ((a + b - 1) // b) * b


def _rotate_interleaved_kernel(c_ref, x_ref, o_ref):
    """Rotate 3-D points stored interleaved along the lane axis.

    c_ref: (5, 384) f32 coefficient rows for relative shifts s = -2,-1,0,+1,+2
           (row si multiplies in[j + s]).
    x_ref / o_ref: (block_rows, 384) blocks of the flat point stream.
    """
    br = x_ref.shape[0]
    chunk = _CHUNK if (br % _CHUNK == 0 and br >= _CHUNK) else br
    n_chunks = br // chunk

    # Hoisted once per block: 5 lane-periodic coefficient rows (3 vregs each).
    c_m2 = c_ref[0]
    c_m1 = c_ref[1]
    c_0 = c_ref[2]
    c_p1 = c_ref[3]
    c_p2 = c_ref[4]

    def body(i, carry):
        r0 = pl.multiple_of(i * chunk, chunk)
        v = x_ref[pl.ds(r0, chunk), :].astype(jnp.float32)
        # pltpu.roll follows jnp.roll convention: roll(v, k)[j] == v[j - k].
        # Wrap-around only happens where the paired coefficient is zero.
        out = c_0 * v
        out = out + c_m1 * pltpu.roll(v, 1, axis=1)           # v[j - 1]
        out = out + c_m2 * pltpu.roll(v, 2, axis=1)           # v[j - 2]
        out = out + c_p1 * pltpu.roll(v, _ROW - 1, axis=1)    # v[j + 1]
        out = out + c_p2 * pltpu.roll(v, _ROW - 2, axis=1)    # v[j + 2]
        o_ref[pl.ds(r0, chunk), :] = out.astype(o_ref.dtype)
        return carry

    lax.fori_loop(0, n_chunks, body, 0)


def _shift_coefficients(R: jax.Array) -> jax.Array:
    """(5, 384) f32 table: row si holds the coefficient of in[j + s] for out[j]."""
    R = R.astype(jnp.float32)
    ch = jnp.arange(_ROW, dtype=jnp.int32) % 3           # channel of lane j
    rows = []
    for s in (-2, -1, 0, 1, 2):
        k = ch + s                                        # source channel
        valid = (k >= 0) & (k <= 2)
        kc = jnp.clip(k, 0, 2)
        rows.append(jnp.where(valid, R[ch, kc], 0.0))
    return jnp.stack(rows)                                # (5, 384)


def _default_block_rows() -> int:
    try:
        kind = jax.devices()[0].device_kind.lower()
    except Exception:
        return 2048
    # v7x: 3.2 TB/s HBM -> bigger slabs amortize the per-step overhead; still
    # only ~24 MiB double-buffered vs 64 MiB physical VMEM per TensorCore.
    if "v7" in kind or "7x" in kind:
        return 4096
    return 2048


def apply_rotation_pallas(x: jax.Array, R: jax.Array, *, block_rows=None) -> jax.Array:
    """y = x.reshape(-1, 3) @ R.T, computed directly in the natural interleaved layout."""
    N, T, V, C = x.shape
    assert C == 3, "RandomPerspectiveBatch expects 3-D coordinates (C == 3)"
    if block_rows is None:
        block_rows = _default_block_rows()

    total = N * T * V * C
    flat = x.reshape(total)                               # natural layout, no transpose
    rows = pl.cdiv(total, _ROW)
    padded_total = rows * _ROW
    if padded_total != total:                             # < 384 elements of padding
        flat = jnp.pad(flat, (0, padded_total - total))
    x2d = flat.reshape(rows, _ROW)

    if rows <= 2 * _CHUNK:
        # Tiny input: one full-array block (full-dim blocks need no 8/16/32 rounding).
        br = rows
    else:
        # Multiple of 32 rows (covers f32/bf16/int8 sublane tiling), capped by
        # block_rows, and small enough to keep >= 2 grid steps (v7x megacore).
        br = min(block_rows, _round_up(pl.cdiv(rows, 2), _CHUNK))
    grid = (pl.cdiv(rows, br),)

    coeffs = _shift_coefficients(R)                       # (5, 384) f32

    y2d = pl.pallas_call(
        _rotate_interleaved_kernel,
        out_shape=jax.ShapeDtypeStruct((rows, _ROW), x.dtype),
        grid=grid,
        in_specs=[
            pl.BlockSpec((5, _ROW), lambda i: (0, 0)),    # coefficients (constant block)
            pl.BlockSpec((br, _ROW), lambda i: (i, 0)),   # point stream slab
        ],
        out_specs=pl.BlockSpec((br, _ROW), lambda i: (i, 0)),
        compiler_params=pltpu.CompilerParams(
            dimension_semantics=("parallel",),            # disjoint output blocks
            vmem_limit_bytes=32 * 1024 * 1024,
        ),
    )(coeffs, x2d)

    y = y2d.reshape(padded_total)
    if padded_total != total:
        y = y[:total]
    return y.reshape(N, T, V, C)


def _rotation_matrix(angles_deg: jax.Array) -> jax.Array:
    """R = Rz @ Ry @ Rx from three angles in degrees (matches the PyTorch module)."""
    a = jnp.deg2rad(angles_deg.astype(jnp.float32))
    cx, sx = jnp.cos(a[0]), jnp.sin(a[0])
    cy, sy = jnp.cos(a[1]), jnp.sin(a[1])
    cz, sz = jnp.cos(a[2]), jnp.sin(a[2])
    one = jnp.ones_like(cx)
    zero = jnp.zeros_like(cx)
    Rx = jnp.stack([jnp.stack([one, zero, zero]),
                    jnp.stack([zero, cx, -sx]),
                    jnp.stack([zero, sx, cx])])
    Ry = jnp.stack([jnp.stack([cy, zero, sy]),
                    jnp.stack([zero, one, zero]),
                    jnp.stack([-sy, zero, cy])])
    Rz = jnp.stack([jnp.stack([cz, -sz, zero]),
                    jnp.stack([sz, cz, zero]),
                    jnp.stack([zero, zero, one])])
    return Rz @ Ry @ Rx


def random_perspective_batch(x: jax.Array, key: jax.Array, max_angle: float = 30.0) -> jax.Array:
    """Pallas implementation of RandomPerspectiveBatch.forward.

    The module's host-side `random.uniform` draw is replaced by a deterministic
    jax.random draw (same distribution); the rotation is applied by the kernel.
    """
    # TODO(synk): host `random.uniform` RNG replaced with jax.random (not bit-identical).
    angles = jax.random.uniform(key, (3,), minval=-max_angle, maxval=max_angle)
    R = _rotation_matrix(angles)
    return apply_rotation_pallas(x, R)


def random_perspective_ref(x: jax.Array, R: jax.Array) -> jax.Array:
    """Pure-JAX reference mirroring the PyTorch code."""
    N, T, V, C = x.shape
    return (x.reshape(-1, C) @ R.T.astype(x.dtype)).reshape(N, T, V, C)


if __name__ == "__main__":
    key = jax.random.PRNGKey(0)
    k_angles, k_data1, k_data2 = jax.random.split(key, 3)

    max_angle = 30.0
    angles = jax.random.uniform(k_angles, (3,), minval=-max_angle, maxval=max_angle)
    R = _rotation_matrix(angles)

    # Small skeleton batch consistent with the module: batch=2, T=8, V=16, C=3.
    x1 = jax.random.normal(k_data1, (2, 8, 16, 3), dtype=jnp.float32)
    out1 = jax.block_until_ready(apply_rotation_pallas(x1, R))
    ref1 = random_perspective_ref(x1, R)
    assert out1.shape == x1.shape
    assert jnp.allclose(out1, ref1, rtol=1e-5, atol=1e-5), "Pallas output differs (small case)"

    # Slightly larger case: exercises multi-step grid, ragged last block and tail padding.
    x2 = jax.random.normal(k_data2, (8, 79, 25, 3), dtype=jnp.float32)
    out2 = jax.block_until_ready(apply_rotation_pallas(x2, R))
    ref2 = random_perspective_ref(x2, R)
    assert jnp.allclose(out2, ref2, rtol=1e-5, atol=1e-5), "Pallas output differs (grid case)"

    # Full module forward with in-script random angles.
    out3 = jax.block_until_ready(random_perspective_batch(x1, k_angles))
    assert out3.shape == x1.shape

    print("KERNEL_OK")
</pallas_src>

<mosaic_0001>
module attributes {stable_mosaic.version = 11 : i64} {
  func.func @_rotate_interleaved_kernel(%arg0: i32, %arg1: memref<5x384xf32, #tpu.memory_space<vmem>>, %arg2: memref<2x384xf32, #tpu.memory_space<vmem>>, %arg3: memref<2x384xf32, #tpu.memory_space<vmem>>) attributes {dimension_semantics = [#tpu.dimension_semantics<parallel>], iteration_bounds = array<i64: 1>, scalar_prefetch = 0 : i64, scratch_operands = 0 : i64, tpu.core_type = #tpu.core_type<tc>, window_params = [{pipeline_mode = #tpu.pipeline_mode<synchronous>, transform_indices = @transform_0, window_bounds = array<i64: 5, 384>}, {transform_indices = @transform_1, window_bounds = array<i64: 2, 384>}, {transform_indices = @transform_2, window_bounds = array<i64: 2, 384>}]} {
    %c0 = arith.constant 0 : index
    %c0_0 = arith.constant 0 : index
    %0 = vector.load %arg1[%c0, %c0_0] : memref<5x384xf32, #tpu.memory_space<vmem>>, vector<1x384xf32>
    %1 = vector.shape_cast %0 : vector<1x384xf32> to vector<384xf32>
    %c1 = arith.constant 1 : index
    %c0_1 = arith.constant 0 : index
    %2 = vector.load %arg1[%c1, %c0_1] : memref<5x384xf32, #tpu.memory_space<vmem>>, vector<1x384xf32>
    %3 = vector.shape_cast %2 : vector<1x384xf32> to vector<384xf32>
    %c2 = arith.constant 2 : index
    %c0_2 = arith.constant 0 : index
    %4 = vector.load %arg1[%c2, %c0_2] : memref<5x384xf32, #tpu.memory_space<vmem>>, vector<1x384xf32>
    %5 = vector.shape_cast %4 : vector<1x384xf32> to vector<384xf32>
    %c3 = arith.constant 3 : index
    %c0_3 = arith.constant 0 : index
    %6 = vector.load %arg1[%c3, %c0_3] : memref<5x384xf32, #tpu.memory_space<vmem>>, vector<1x384xf32>
    %7 = vector.shape_cast %6 : vector<1x384xf32> to vector<384xf32>
    %c4 = arith.constant 4 : index
    %c0_4 = arith.constant 0 : index
    %8 = vector.load %arg1[%c4, %c0_4] : memref<5x384xf32, #tpu.memory_space<vmem>>, vector<1x384xf32>
    %9 = vector.shape_cast %8 : vector<1x384xf32> to vector<384xf32>
    %c0_i32 = arith.constant 0 : i32
    %c2_i32 = arith.constant 2 : i32
    %10 = arith.muli %c0_i32, %c2_i32 : i32
    %11 = tpu.assume_multiple %10, 2 : i32
    %12 = arith.index_cast %11 : i32 to index
    %c0_5 = arith.constant 0 : index
    %13 = vector.load %arg2[%12, %c0_5] : memref<2x384xf32, #tpu.memory_space<vmem>>, vector<2x384xf32>
    %14 = vector.shape_cast %5 : vector<384xf32> to vector<1x384xf32>
    %15 = vector.broadcast %14 : vector<1x384xf32> to vector<2x384xf32>
    %16 = arith.mulf %15, %13 : vector<2x384xf32>
    %c1_i32 = arith.constant 1 : i32
    %17 = tpu.dynamic_rotate %13 by %c1_i32 dim 1 : vector<2x384xf32>, i32 -> vector<2x384xf32>
    %18 = vector.shape_cast %3 : vector<384xf32> to vector<1x384xf32>
    %19 = vector.broadcast %18 : vector<1x384xf32> to vector<2x384xf32>
    %20 = arith.mulf %19, %17 : vector<2x384xf32>
    %21 = arith.addf %16, %20 : vector<2x384xf32>
    %c2_i32_6 = arith.constant 2 : i32
    %22 = tpu.dynamic_rotate %13 by %c2_i32_6 dim 1 : vector<2x384xf32>, i32 -> vector<2x384xf32>
    %23 = vector.shape_cast %1 : vector<384xf32> to vector<1x384xf32>
    %24 = vector.broadcast %23 : vector<1x384xf32> to vector<2x384xf32>
    %25 = arith.mulf %24, %22 : vector<2x384xf32>
    %26 = arith.addf %21, %25 : vector<2x384xf32>
    %c383_i32 = arith.constant 383 : i32
    %27 = tpu.dynamic_rotate %13 by %c383_i32 dim 1 : vector<2x384xf32>, i32 -> vector<2x384xf32>
    %28 = vector.shape_cast %7 : vector<384xf32> to vector<1x384xf32>
    %29 = vector.broadcast %28 : vector<1x384xf32> to vector<2x384xf32>
    %30 = arith.mulf %29, %27 : vector<2x384xf32>
    %31 = arith.addf %26, %30 : vector<2x384xf32>
    %c382_i32 = arith.constant 382 : i32
    %32 = tpu.dynamic_rotate %13 by %c382_i32 dim 1 : vector<2x384xf32>, i32 -> vector<2x384xf32>
    %33 = vector.shape_cast %9 : vector<384xf32> to vector<1x384xf32>
    %34 = vector.broadcast %33 : vector<1x384xf32> to vector<2x384xf32>
    %35 = arith.mulf %34, %32 : vector<2x384xf32>
    %36 = arith.addf %31, %35 : vector<2x384xf32>
    %37 = arith.index_cast %11 : i32 to index
    %c0_7 = arith.constant 0 : index
    %38 = vector.load %arg3[%37, %c0_7] : memref<2x384xf32, #tpu.memory_space<vmem>>, vector<2x384xf32>
    tpu.vector_store %arg3[%37, %c0_7], %36 {strides = array<i32>} : memref<2x384xf32, #tpu.memory_space<vmem>>, vector<2x384xf32>,
    %c1_i32_8 = arith.constant 1 : i32
    return
  }
  func.func @transform_0(%arg0: i32) -> (i32, i32) {
    %c0_i32 = arith.constant 0 : i32
    %c0_i32_0 = arith.constant 0 : i32
    %c0_i32_1 = arith.constant 0 : i32
    return %c0_i32, %c0_i32_0 : i32, i32
  }
  func.func @transform_1(%arg0: i32) -> (i32, i32) {
    %c0_i32 = arith.constant 0 : i32
    %c0_i32_0 = arith.constant 0 : i32
    return %arg0, %c0_i32 : i32, i32
  }
  func.func @transform_2(%arg0: i32) -> (i32, i32) {
    %c0_i32 = arith.constant 0 : i32
    %c0_i32_0 = arith.constant 0 : i32
    return %arg0, %c0_i32 : i32, i32
  }
}

</mosaic_0001>

<llo_original>
// kernel: tpu_custom_call.1
$region0: #{tpu_custom_call.1}
  #allocation0 [shape = 'u32[]', space=smem, size = 0x4, offset = 0x4, fixed_abs, tag = 'smem constant byte address 0x4 - core index']
  #allocation1 [shape = 'u32[144,128]{1,0:T(1,128)}', space=vmem, size = 0x12000, scoped, tag = 'internal scratch']
  %s0 = inlined_call_operand.hbm [shape: f32[5,384], index: 0, kind: input, shape index: {}]
  %s1 = inlined_call_operand.hbm [shape: f32[2,384], index: 1, kind: input, shape index: {}]
  %s2 = inlined_call_operand.hbm [shape: f32[2,384], index: 2, kind: output, shape index: {}]
  %s3 = sld [smem:[#allocation0]]
  $region26: #{tpu_custom_call.1} parent=0
    _
  %s5 = ssub.s32 1, %s3
  %s6 = scalar_select 0, %s5, %s3
  $region1: #{tpu_custom_call.1} parent=0
    #allocation2 [shape = 'u8[12288]{0}', space=vmem, size = 0x3000, scoped, tag = 'input window, operand 0, single buffered']
    #allocation3 [shape = 's32[1]{0}', space=sflag, size = 0x4, scoped, tag = 'scoped memory for tpu_custom_call.1']
    #allocation4 [shape = 's32[1]{0}', space=sflag, size = 0x4, scoped, tag = 'scoped memory for tpu_custom_call.1']
    #allocation5 [shape = 'u8[3072]{0}', space=vmem, size = 0xc00, scoped, tag = 'input window, operand 1, single buffered']
    #allocation6 [shape = 's32[1]{0}', space=sflag, size = 0x4, scoped, tag = 'scoped memory for tpu_custom_call.1']
    #allocation7 [shape = 'u8[3072]{0}', space=vmem, size = 0xc00, scoped, tag = 'output window, operand 0, single buffered']
    %7 = vsyncpa [#allocation3], 0
    %8 = vsyncpa [#allocation6], 0
    %9 = vsyncpa [#allocation4], 0
    // Predicated region
    $region2: #{tpu_custom_call.1} parent=1 // pred_check
      _
    $region3: #{tpu_custom_call.1} parent=1 // pred_check_branch
      %11 = sbr.rel (0) target = $region5
    $region4: #{tpu_custom_call.1} parent=1 // pred_region
      %s13 = ssub.s32 384, 384
      %14 = vsyncadd [#allocation3], %s13
      %s16 = sshll.u32 [#allocation2], 4
      %s17 = int_to_ptr.vmem [resolvable:$true] %s16
      %19 = dma.hbm_to_vmem [thread:$0]  %s0, 384, %s17, [#allocation3]
    $region5: #{tpu_custom_call.1} parent=1 // pred_fallthru
      _
    // Predicated region
    $region6: #{tpu_custom_call.1} parent=1 // pred_check
      _
    $region7: #{tpu_custom_call.1} parent=1 // pred_check_branch
      %21 = sbr.rel (0) target = $region9
    $region8: #{tpu_custom_call.1} parent=1 // pred_region
      %s23 = ssub.s32 96, 96
      %24 = vsyncadd [#allocation6], %s23
      %s26 = sshll.u32 [#allocation5], 4
      %s27 = int_to_ptr.vmem [resolvable:$true] %s26
      %29 = dma.hbm_to_vmem [thread:$0]  %s1, 96, %s27, [#allocation6]
    $region9: #{tpu_custom_call.1} parent=1 // pred_fallthru
      _
    // Predicated region
    $region10: #{tpu_custom_call.1} parent=1 // pred_check
      _
    $region11: #{tpu_custom_call.1} parent=1 // pred_check_branch
      %31 = sbr.rel (0) target = $region13
    $region12: #{tpu_custom_call.1} parent=1 // pred_region
      %32 = dma.done [#allocation3], 384
    $region13: #{tpu_custom_call.1} parent=1 // pred_fallthru
      _
    // Predicated region
    $region14: #{tpu_custom_call.1} parent=1 // pred_check
      _
    $region15: #{tpu_custom_call.1} parent=1 // pred_check_branch
      %34 = sbr.rel (0) target = $region17
    $region16: #{tpu_custom_call.1} parent=1 // pred_region
      %35 = dma.done [#allocation6], 96
    $region17: #{tpu_custom_call.1} parent=1 // pred_fallthru
      _
    %v36 = vld [vmem:[#allocation2] ss:$8 sm:$0x7]
    %s37 = scalar_lea.vmem [#allocation2], 1
    %v38 = vld [vmem:[%s37] ss:$8 sm:$0x7]
    %s39 = scalar_lea.vmem [#allocation2], 2
    %v40 = vld [vmem:[%s39] ss:$8 sm:$0x7]
    %s41 = scalar_lea.vmem [#allocation2], 3
    %v42 = vld [vmem:[%s41] ss:$8 sm:$0x7]
    %s43 = scalar_lea.vmem [#allocation2], 4
    %v44 = vld [vmem:[%s43] ss:$8 sm:$0x7]
    %s45 = smul.u32 0, 3
    %s46 = smul.addr %s45, 2
    %s47 = scalar_lea.vmem [#allocation5], %s46
    %v48 = vld [vmem:[%s47] sm:$0x3f]
    %v50 = vlaneseq
    %v51 = vshrl.u32 %v50, 7
    %v52 = vsub.s32 0, %v51
    %v53 = vrot.slane %v40, %v52
    %v54 = vlaneseq
    %v55 = vshrl.u32 %v54, 7
    %v56 = vsub.s32 1, %v55
    %v57 = vrot.slane %v40, %v56
    %v58 = vlaneseq
    %v59 = vshrl.u32 %v58, 7
    %v60 = vsub.s32 2, %v59
    %v61 = vrot.slane %v40, %v60
    %v66 = vcombine.high %v48, %v48
    %v68 = vunpack.c.l.s4 1983009808
    %v69 = vunpack.c.0.s8 %v68
    %v70 = vlaneseq
    %v71 = vshrl.u32 %v70, 7
    %v72 = vsub.s32 %v69, %v71
    %v73 = vrot.slane %v48, %v72
    %v75 = vunpack.c.l.s4 1983009808
    %v76 = vunpack.c.0.s8 %v75
    %v77 = vlaneseq
    %v78 = vshrl.u32 %v77, 7
    %v79 = vsub.s32 %v76, %v78
    %v80 = vrot.slane %v66, %v79
    %v81 = vcombine.high %v73, %v73
    %v85 = vmul.f32 %v53, %v73
    %v86 = vmul.f32 %v57, %v81
    %v87 = vmul.f32 %v61, %v80
    %88 = vrot.lane.b32.xlu0 %v73, 1
    %v89 = vpop.permute.xlu0 %88
    %90 = vrot.lane.b32.xlu0 %v81, 1
    %v91 = vpop.permute.xlu0 %90
    %92 = vrot.lane.b32.xlu0 %v80, 1
    %v93 = vpop.permute.xlu0 %92
    %v94 = vlaneseq
    %v95 = vand.u32 %v94, 127
    %vm96 = vcmp.lt.s32.totalorder %v95, 1
    %v97 = vsel %vm96, %v91, %v93
    %v98 = vsel %vm96, %v89, %v91
    %v99 = vsel %vm96, %v93, %v89
    %v101 = vlaneseq
    %v102 = vshrl.u32 %v101, 7
    %v103 = vsub.s32 0, %v102
    %v104 = vrot.slane %v38, %v103
    %v105 = vlaneseq
    %v106 = vshrl.u32 %v105, 7
    %v107 = vsub.s32 1, %v106
    %v108 = vrot.slane %v38, %v107
    %v109 = vlaneseq
    %v110 = vshrl.u32 %v109, 7
    %v111 = vsub.s32 2, %v110
    %v112 = vrot.slane %v38, %v111
    %v116 = vmul.f32 %v104, %v99
    %v117 = vmul.f32 %v108, %v98
    %v118 = vmul.f32 %v112, %v97
    %v119 = vadd.f32 %v85, %v116
    %v120 = vadd.f32 %v86, %v117
    %v121 = vadd.f32 %v87, %v118
    %122 = vrot.lane.b32.xlu0 %v73, 2
    %v123 = vpop.permute.xlu0 %122
    %124 = vrot.lane.b32.xlu0 %v81, 2
    %v125 = vpop.permute.xlu0 %124
    %126 = vrot.lane.b32.xlu0 %v80, 2
    %v127 = vpop.permute.xlu0 %126
    %vm128 = vcmp.lt.s32.totalorder %v95, 2
    %v129 = vsel %vm128, %v125, %v127
    %v130 = vsel %vm128, %v123, %v125
    %v131 = vsel %vm128, %v127, %v123
    %v133 = vlaneseq
    %v134 = vshrl.u32 %v133, 7
    %v135 = vsub.s32 0, %v134
    %v136 = vrot.slane %v36, %v135
    %v137 = vlaneseq
    %v138 = vshrl.u32 %v137, 7
    %v139 = vsub.s32 1, %v138
    %v140 = vrot.slane %v36, %v139
    %v141 = vlaneseq
    %v142 = vshrl.u32 %v141, 7
    %v143 = vsub.s32 2, %v142
    %v144 = vrot.slane %v36, %v143
    %v148 = vmul.f32 %v136, %v131
    %v149 = vmul.f32 %v140, %v130
    %v150 = vmul.f32 %v144, %v129
    %v151 = vadd.f32 %v119, %v148
    %v152 = vadd.f32 %v120, %v149
    %v153 = vadd.f32 %v121, %v150
    %154 = vrot.lane.b32.xlu0 %v73, 127
    %v155 = vpop.permute.xlu0 %154
    %156 = vrot.lane.b32.xlu0 %v81, 127
    %v157 = vpop.permute.xlu0 %156
    %158 = vrot.lane.b32.xlu0 %v80, 127
    %v159 = vpop.permute.xlu0 %158
    %vm160 = vcmp.lt.s32.totalorder %v95, 127
    %v161 = vsel %vm160, %v157, %v159
    %v162 = vsel %vm160, %v155, %v157
    %v163 = vsel %vm160, %v159, %v155
    %v165 = vlaneseq
    %v166 = vshrl.u32 %v165, 7
    %v167 = vsub.s32 0, %v166
    %v168 = vrot.slane %v42, %v167
    %v169 = vlaneseq
    %v170 = vshrl.u32 %v169, 7
    %v171 = vsub.s32 1, %v170
    %v172 = vrot.slane %v42, %v171
    %v173 = vlaneseq
    %v174 = vshrl.u32 %v173, 7
    %v175 = vsub.s32 2, %v174
    %v176 = vrot.slane %v42, %v175
    %v180 = vmul.f32 %v168, %v162
    %v181 = vmul.f32 %v172, %v161
    %v182 = vmul.f32 %v176, %v163
    %v183 = vadd.f32 %v151, %v180
    %v184 = vadd.f32 %v152, %v181
    %v185 = vadd.f32 %v153, %v182
    %186 = vrot.lane.b32.xlu0 %v73, 126
    %v187 = vpop.permute.xlu0 %186
    %188 = vrot.lane.b32.xlu0 %v81, 126
    %v189 = vpop.permute.xlu0 %188
    %190 = vrot.lane.b32.xlu0 %v80, 126
    %v191 = vpop.permute.xlu0 %190
    %vm192 = vcmp.lt.s32.totalorder %v95, 126
    %v193 = vsel %vm192, %v189, %v191
    %v194 = vsel %vm192, %v187, %v189
    %v195 = vsel %vm192, %v191, %v187
    %v197 = vlaneseq
    %v198 = vshrl.u32 %v197, 7
    %v199 = vsub.s32 0, %v198
    %v200 = vrot.slane %v44, %v199
    %v201 = vlaneseq
    %v202 = vshrl.u32 %v201, 7
    %v203 = vsub.s32 1, %v202
    %v204 = vrot.slane %v44, %v203
    %v205 = vlaneseq
    %v206 = vshrl.u32 %v205, 7
    %v207 = vsub.s32 2, %v206
    %v208 = vrot.slane %v44, %v207
    %v212 = vmul.f32 %v200, %v194
    %v213 = vmul.f32 %v204, %v193
    %v214 = vmul.f32 %v208, %v195
    %v215 = vadd.f32 %v183, %v212
    %v216 = vadd.f32 %v184, %v213
    %v217 = vadd.f32 %v185, %v214
    %v221 = vcombine.low %v215, %v216
    %v223 = vunpack.c.l.s4 1983009808
    %v224 = vunpack.c.0.s8 %v223
    %v225 = vlaneseq
    %v226 = vshrl.u32 %v225, 7
    %v227 = vsub.s32 %v224, %v226
    %v228 = vrot.slane %v221, %v227
    %v230 = vunpack.c.l.s4 1983009808
    %v231 = vunpack.c.0.s8 %v230
    %v232 = vlaneseq
    %v233 = vshrl.u32 %v232, 7
    %v234 = vsub.s32 %v231, %v233
    %v235 = vrot.slane %v217, %v234
    %v236 = vcombine.low %v228, %v235
    %s238 = smul.addr %s45, 2
    %s239 = scalar_lea.vmem [#allocation7], %s238
    %240 = vst [vmem:[%s239] sm:$0x3f] %v236
    // Predicated region
    $region18: #{tpu_custom_call.1} parent=1 // pred_check
      _
    $region19: #{tpu_custom_call.1} parent=1 // pred_check_branch
      %242 = sbr.rel (0) target = $region21
    $region20: #{tpu_custom_call.1} parent=1 // pred_region
      %s244 = ssub.s32 96, 96
      %245 = vsyncadd [#allocation4], %s244
      %s247 = sshll.u32 [#allocation7], 4
      %s248 = int_to_ptr.vmem [resolvable:$true] %s247
      %250 = dma.vmem_to_hbm [thread:$0]  %s248, 96, %s2, [#allocation4]
    $region21: #{tpu_custom_call.1} parent=1 // pred_fallthru
      _
    // Predicated region
    $region22: #{tpu_custom_call.1} parent=1 // pred_check
      _
    $region23: #{tpu_custom_call.1} parent=1 // pred_check_branch
      %252 = sbr.rel (0) target = $region25
    $region24: #{tpu_custom_call.1} parent=1 // pred_region
      %253 = dma.done [#allocation4], 96
    $region25: #{tpu_custom_call.1} parent=1 // pred_fallthru
      _
    %254 = vsyncpa [#allocation3], 1
    %255 = vsyncpa [#allocation6], 1
    %256 = vsyncpa [#allocation4], 1

</llo_original>
